<compile_context>
chip_gen: v6e
topology: v6e:2x2x1
jax: 0.10.0
libtpu: 0.0.40
codegen_flags: <defaults>
</compile_context>

<pallas_src>
import jax
import jax.numpy as jnp
from jax.experimental import pallas as pl
from jax.experimental.pallas import tpu as pltpu


def _affine_kernel(x_ref, inv_ref, shift_ref, o_ref):
    # (x - mean) / (std + eps)  ==  x * inv + shift   (single FMA per element)
    o_ref[...] = x_ref[...] * inv_ref[...] + shift_ref[...]


def _pick_row_tile(rows, row_bytes, tile_bytes):
    """Rows per block: full extent if it fits the per-buffer byte cap (always a
    legal block), else the largest multiple of 8 under the cap (ragged tail
    writes are masked by Pallas)."""
    cap = max(8, (tile_bytes // row_bytes) // 8 * 8)
    return rows if rows <= cap else cap


def _compiler_params():
    return pltpu.CompilerParams(
        dimension_semantics=("parallel",),
        vmem_limit_bytes=48 << 20,
    )


def normalizer_forward(x, mean, std, epsilon=1e-6, *, tile_bytes=8 << 20):
    """Pallas implementation of Normalizer.forward.

    x: (B, D) float32; mean, std: (D,) float32.
    """
    B, D = x.shape
    dtype = x.dtype
    itemsize = jnp.dtype(dtype).itemsize

    # Hoisted: one D-sized divide in the wrapper instead of one per grid step.
    inv = (1.0 / (std.astype(dtype) + epsilon)).astype(dtype)     # (D,)
    shift = (-mean.astype(dtype) * inv).astype(dtype)             # (D,)

    # ---- Fast path: lane-dense flat (rows, 128) view, no copies, no padding.
    if D <= 128 and 128 % D == 0 and B % (128 // D) == 0:
        reps = 128 // D
        rows = (B * D) // 128
        x_flat = x.reshape(rows, 128)                 # row-major view, no copy
        inv_row = jnp.tile(inv, reps).reshape(1, 128)
        shift_row = jnp.tile(shift, reps).reshape(1, 128)

        TB = _pick_row_tile(rows, 128 * itemsize, tile_bytes)
        grid = (pl.cdiv(rows, TB),)

        out_flat = pl.pallas_call(
            _affine_kernel,
            out_shape=jax.ShapeDtypeStruct((rows, 128), dtype),
            grid=grid,
            in_specs=[
                pl.BlockSpec((TB, 128), lambda i: (i, 0)),
                pl.BlockSpec((1, 128), lambda i: (0, 0)),
                pl.BlockSpec((1, 128), lambda i: (0, 0)),
            ],
            out_specs=pl.BlockSpec((TB, 128), lambda i: (i, 0)),
            compiler_params=_compiler_params(),
        )(x_flat, inv_row, shift_row)
        return out_flat.reshape(B, D)

    # ---- Fallback: keep (B, D) layout; last block dim = full D (legal under
    # the (8,128) rule), cdiv grid over rows, masked ragged tail. No padding,
    # no pad/unpad copies.
    inv_row = inv.reshape(1, D)
    shift_row = shift.reshape(1, D)
    TB = _pick_row_tile(B, D * itemsize, tile_bytes)
    grid = (pl.cdiv(B, TB),)

    return pl.pallas_call(
        _affine_kernel,
        out_shape=jax.ShapeDtypeStruct((B, D), dtype),
        grid=grid,
        in_specs=[
            pl.BlockSpec((TB, D), lambda i: (i, 0)),
            pl.BlockSpec((1, D), lambda i: (0, 0)),
            pl.BlockSpec((1, D), lambda i: (0, 0)),
        ],
        out_specs=pl.BlockSpec((TB, D), lambda i: (i, 0)),
        compiler_params=_compiler_params(),
    )(x, inv_row, shift_row)


def _check(B, D, key, epsilon=1e-6, **kw):
    kx, km, ks = jax.random.split(key, 3)
    x = jax.random.normal(kx, (B, D), dtype=jnp.float32)
    mean = jax.random.normal(km, (D,), dtype=jnp.float32)
    std = jnp.abs(jax.random.normal(ks, (D,), dtype=jnp.float32)) + 0.5
    out = jax.block_until_ready(normalizer_forward(x, mean, std, epsilon, **kw))
    ref = (x - mean[None, :]) / (std[None, :] + epsilon)
    assert out.shape == (B, D)
    assert jnp.allclose(out, ref, atol=1e-5, rtol=1e-5)
    return out


if __name__ == "__main__":
    key = jax.random.PRNGKey(0)
    k0, k1, k2 = jax.random.split(key, 3)

    # Primary demo (MBPO-sized): flat lane-dense path, single tile.
    _check(8, 32, k0)

    # Fallback path: D does not divide 128, full-extent blocks.
    _check(6, 20, k1)

    # Multi-tile + masked ragged tail (tiny tile cap to force grid > 1).
    _check(50, 32, k2, tile_bytes=4096)

    print("KERNEL_OK")
</pallas_src>

<mosaic_0001>
module attributes {stable_mosaic.version = 11 : i64} {
  func.func @_affine_kernel(%arg0: i32, %arg1: memref<2x128xf32, #tpu.memory_space<vmem>>, %arg2: memref<1x128xf32, #tpu.memory_space<vmem>>, %arg3: memref<1x128xf32, #tpu.memory_space<vmem>>, %arg4: memref<2x128xf32, #tpu.memory_space<vmem>>) attributes {dimension_semantics = [#tpu.dimension_semantics<parallel>], iteration_bounds = array<i64: 1>, scalar_prefetch = 0 : i64, scratch_operands = 0 : i64, tpu.core_type = #tpu.core_type<tc>, window_params = [{transform_indices = @transform_0, window_bounds = array<i64: 2, 128>}, {pipeline_mode = #tpu.pipeline_mode<synchronous>, transform_indices = @transform_1, window_bounds = array<i64: 1, 128>}, {pipeline_mode = #tpu.pipeline_mode<synchronous>, transform_indices = @transform_2, window_bounds = array<i64: 1, 128>}, {transform_indices = @transform_3, window_bounds = array<i64: 2, 128>}]} {
    %c0 = arith.constant 0 : index
    %c0_0 = arith.constant 0 : index
    %0 = vector.load %arg1[%c0, %c0_0] : memref<2x128xf32, #tpu.memory_space<vmem>>, vector<2x128xf32>
    %c0_1 = arith.constant 0 : index
    %c0_2 = arith.constant 0 : index
    %1 = vector.load %arg2[%c0_1, %c0_2] : memref<1x128xf32, #tpu.memory_space<vmem>>, vector<1x128xf32>
    %2 = vector.broadcast %1 : vector<1x128xf32> to vector<2x128xf32>
    %3 = arith.mulf %0, %2 : vector<2x128xf32>
    %c0_3 = arith.constant 0 : index
    %c0_4 = arith.constant 0 : index
    %4 = vector.load %arg3[%c0_3, %c0_4] : memref<1x128xf32, #tpu.memory_space<vmem>>, vector<1x128xf32>
    %5 = vector.broadcast %4 : vector<1x128xf32> to vector<2x128xf32>
    %6 = arith.addf %3, %5 : vector<2x128xf32>
    %c0_5 = arith.constant 0 : index
    %c0_6 = arith.constant 0 : index
    %7 = vector.load %arg4[%c0_5, %c0_6] : memref<2x128xf32, #tpu.memory_space<vmem>>, vector<2x128xf32>
    tpu.vector_store %arg4[%c0_5, %c0_6], %6 {strides = array<i32>} : memref<2x128xf32, #tpu.memory_space<vmem>>, vector<2x128xf32>,
    return
  }
  func.func @transform_0(%arg0: i32) -> (i32, i32) {
    %c0_i32 = arith.constant 0 : i32
    %c0_i32_0 = arith.constant 0 : i32
    return %arg0, %c0_i32 : i32, i32
  }
  func.func @transform_1(%arg0: i32) -> (i32, i32) {
    %c0_i32 = arith.constant 0 : i32
    %c0_i32_0 = arith.constant 0 : i32
    %c0_i32_1 = arith.constant 0 : i32
    return %c0_i32, %c0_i32_0 : i32, i32
  }
  func.func @transform_2(%arg0: i32) -> (i32, i32) {
    %c0_i32 = arith.constant 0 : i32
    %c0_i32_0 = arith.constant 0 : i32
    %c0_i32_1 = arith.constant 0 : i32
    return %c0_i32, %c0_i32_0 : i32, i32
  }
  func.func @transform_3(%arg0: i32) -> (i32, i32) {
    %c0_i32 = arith.constant 0 : i32
    %c0_i32_0 = arith.constant 0 : i32
    return %arg0, %c0_i32 : i32, i32
  }
}

</mosaic_0001>

<llo_original>
// kernel: tpu_custom_call.1
$region0: #{tpu_custom_call.1}
  #allocation0 [shape = 'u32[]', space=smem, size = 0x4, offset = 0x4, fixed_abs, tag = 'smem constant byte address 0x4 - core index']
  #allocation1 [shape = 'u32[144,128]{1,0:T(1,128)}', space=vmem, size = 0x12000, scoped, tag = 'internal scratch']
  %s0 = inlined_call_operand.hbm [shape: f32[2,128], index: 0, kind: input, shape index: {}]
  %s1 = inlined_call_operand.vmem [shape: f32[1,128], index: 1, kind: input, shape index: {}]
  %s2 = inlined_call_operand.vmem [shape: f32[1,128], index: 2, kind: input, shape index: {}]
  %s3 = inlined_call_operand.hbm [shape: f32[2,128], index: 3, kind: output, shape index: {}]
  %s4 = sld [smem:[#allocation0]]
  $region26: #{tpu_custom_call.1} parent=0
    _
  %s6 = ssub.s32 1, %s4
  %s7 = scalar_select 0, %s6, %s4
  $region1: #{tpu_custom_call.1} parent=0
    #allocation2 [shape = 'u8[1024]{0}', space=vmem, size = 0x400, scoped, tag = 'input window, operand 0, single buffered']
    #allocation3 [shape = 's32[1]{0}', space=sflag, size = 0x4, scoped, tag = 'scoped memory for tpu_custom_call.1']
    #allocation4 [shape = 's32[1]{0}', space=sflag, size = 0x4, scoped, tag = 'scoped memory for tpu_custom_call.1']
    #allocation5 [shape = 'u8[1024]{0}', space=vmem, size = 0x400, scoped, tag = 'output window, operand 0, single buffered']
    %8 = vsyncpa [#allocation3], 0
    %9 = vsyncpa [#allocation4], 0
    // Predicated region
    $region2: #{tpu_custom_call.1} parent=1 // pred_check
      _
    $region3: #{tpu_custom_call.1} parent=1 // pred_check_branch
      %11 = sbr.rel (0) target = $region5
    $region4: #{tpu_custom_call.1} parent=1 // pred_region
      %s13 = ssub.s32 32, 32
      %14 = vsyncadd [#allocation3], %s13
      %s16 = sshll.u32 [#allocation2], 4
      %s17 = int_to_ptr.vmem [resolvable:$true] %s16
      %19 = dma.hbm_to_vmem [thread:$0]  %s0, 32, %s17, [#allocation3]
    $region5: #{tpu_custom_call.1} parent=1 // pred_fallthru
      _
    // Predicated region
    $region6: #{tpu_custom_call.1} parent=1 // pred_check
      _
    $region7: #{tpu_custom_call.1} parent=1 // pred_check_branch
      %21 = sbr.rel (0) target = $region9
    $region8: #{tpu_custom_call.1} parent=1 // pred_region
      _
    $region9: #{tpu_custom_call.1} parent=1 // pred_fallthru
      _
    // Predicated region
    $region10: #{tpu_custom_call.1} parent=1 // pred_check
      _
    $region11: #{tpu_custom_call.1} parent=1 // pred_check_branch
      %23 = sbr.rel (0) target = $region13
    $region12: #{tpu_custom_call.1} parent=1 // pred_region
      _
    $region13: #{tpu_custom_call.1} parent=1 // pred_fallthru
      _
    // Predicated region
    $region14: #{tpu_custom_call.1} parent=1 // pred_check
      _
    $region15: #{tpu_custom_call.1} parent=1 // pred_check_branch
      %25 = sbr.rel (0) target = $region17
    $region16: #{tpu_custom_call.1} parent=1 // pred_region
      %26 = dma.done [#allocation3], 32
    $region17: #{tpu_custom_call.1} parent=1 // pred_fallthru
      _
    %v27 = vld [vmem:[#allocation2] sm:$0x3]
    %v28 = vld [vmem:[%s1] sm:$0x1]
    %v30 = vlaneseq
    %v31 = vshrl.u32 %v30, 7
    %v32 = vsub.s32 0, %v31
    %v33 = vrot.slane %v28, %v32
    %v35 = vmul.f32 %v27, %v33
    %v36 = vld [vmem:[%s2] sm:$0x1]
    %v38 = vlaneseq
    %v39 = vshrl.u32 %v38, 7
    %v40 = vsub.s32 0, %v39
    %v41 = vrot.slane %v36, %v40
    %v43 = vadd.f32 %v35, %v41
    %44 = vst [vmem:[#allocation5] sm:$0x3] %v43
    // Predicated region
    $region18: #{tpu_custom_call.1} parent=1 // pred_check
      _
    $region19: #{tpu_custom_call.1} parent=1 // pred_check_branch
      %46 = sbr.rel (0) target = $region21
    $region20: #{tpu_custom_call.1} parent=1 // pred_region
      %s48 = ssub.s32 32, 32
      %49 = vsyncadd [#allocation4], %s48
      %s51 = sshll.u32 [#allocation5], 4
      %s52 = int_to_ptr.vmem [resolvable:$true] %s51
      %54 = dma.vmem_to_hbm [thread:$0]  %s52, 32, %s3, [#allocation4]
    $region21: #{tpu_custom_call.1} parent=1 // pred_fallthru
      _
    // Predicated region
    $region22: #{tpu_custom_call.1} parent=1 // pred_check
      _
    $region23: #{tpu_custom_call.1} parent=1 // pred_check_branch
      %56 = sbr.rel (0) target = $region25
    $region24: #{tpu_custom_call.1} parent=1 // pred_region
      %57 = dma.done [#allocation4], 32
    $region25: #{tpu_custom_call.1} parent=1 // pred_fallthru
      _
    %58 = vsyncpa [#allocation3], 1
    %59 = vsyncpa [#allocation4], 1

</llo_original>
